<compile_context>
chip_gen: v5e
topology: v5e:2x2
jax: 0.10.0
libtpu: 0.0.40
codegen_flags: <defaults>
</compile_context>

<pallas_src>
import jax
import jax.numpy as jnp
from jax import lax
from jax.experimental import pallas as pl
from jax.experimental.pallas import tpu as pltpu


def _bn_stats_kernel(x_ref, sum_ref, sq_ref):
    """Accumulate per-channel sum / sum-of-squares across the batch grid axis."""
    @pl.when(pl.program_id(0) == 0)
    def _():
        sum_ref[...] = jnp.zeros_like(sum_ref)
        sq_ref[...] = jnp.zeros_like(sq_ref)

    x = x_ref[0]                                        # (Cin, H*W) f32
    sum_ref[...] += jnp.sum(x, axis=1, keepdims=True)   # (Cin, 1)
    sq_ref[...] += jnp.sum(x * x, axis=1, keepdims=True)


def _make_bn_relu_conv3_kernel(H, W, Cin):
    HW = H * W

    def kernel(x_ref, scale_ref, shift_ref, w_ref, b_ref, o_ref, slab_ref):
        # ---- BN (scale/shift pre-folded) + ReLU, f32 on the VPU.
        y = jnp.maximum(x_ref[0] * scale_ref[...] + shift_ref[...], 0.0)  # (Cin, HW)

        # Per-lane (output-pixel) coordinates for boundary masking.
        col = lax.broadcasted_iota(jnp.int32, (1, HW), 1)
        w_idx = col % W
        h_idx = col // W

        # ---- im2col: 9 taps as lane rolls + masks -> (9*Cin, HW) slab.
        for dy in range(3):
            for dx in range(3):
                k = dy * 3 + dx
                off = (dy - 1) * W + (dx - 1)
                # shifted[c, h*W + w] = y[c, (h+dy-1)*W + (w+dx-1)]  (mod HW)
                shifted = pltpu.roll(y, shift=(-off) % HW, axis=1) if off != 0 else y
                hv = h_idx + (dy - 1)
                wv = w_idx + (dx - 1)
                valid = (hv >= 0) & (hv < H) & (wv >= 0) & (wv < W)   # (1, HW)
                slab_ref[k * Cin:(k + 1) * Cin, :] = jnp.where(valid, shifted, 0.0)

        # ---- single MXU contraction: (Cout, 9*Cin) @ (9*Cin, HW) -> (Cout, HW)
        acc = jnp.dot(w_ref[...],                               # bf16 weights
                      slab_ref[...].astype(jnp.bfloat16),       # bf16 activations
                      preferred_element_type=jnp.float32)
        o_ref[0] = (acc + b_ref[...]).astype(o_ref.dtype)

    return kernel


def bn_relu_conv3(x_nchw, gamma, beta, w_oihw, bias, eps=1e-5):
    """Forward pass of BnReluConv3 (training-mode BN) via Pallas TPU kernels.

    x_nchw: (N, Cin, H, W) float32
    gamma, beta: (Cin,) BN affine params
    w_oihw: (Cout, Cin, 3, 3) conv weights (PyTorch layout)
    bias:   (Cout,) conv bias
    returns (N, Cout, H, W) float32
    """
    N, Cin, H, W = x_nchw.shape
    Cout = w_oihw.shape[0]
    HW = H * W

    # NCHW is already channel-major: flattening (H, W) is a free reshape.
    x_flat = x_nchw.reshape(N, Cin, HW).astype(jnp.float32)

    # ---- Pallas prologue: per-channel batch statistics (one pass over x).
    sums, sqs = pl.pallas_call(
        _bn_stats_kernel,
        out_shape=(jax.ShapeDtypeStruct((Cin, 1), jnp.float32),
                   jax.ShapeDtypeStruct((Cin, 1), jnp.float32)),
        grid_spec=pltpu.PrefetchScalarGridSpec(
            num_scalar_prefetch=0,
            grid=(N,),
            in_specs=[pl.BlockSpec((1, Cin, HW), lambda n: (n, 0, 0))],
            out_specs=(pl.BlockSpec((Cin, 1), lambda n: (0, 0)),
                       pl.BlockSpec((Cin, 1), lambda n: (0, 0))),
        ),
        compiler_params=pltpu.CompilerParams(
            dimension_semantics=("arbitrary",)),
    )(x_flat)

    cnt = float(N * HW)
    mean = sums[:, 0] / cnt
    var = jnp.maximum(sqs[:, 0] / cnt - mean * mean, 0.0)   # biased (training BN)
    scale = gamma.astype(jnp.float32) / jnp.sqrt(var + eps)
    shift = beta.astype(jnp.float32) - mean * scale

    # (Cout, Cin, 3, 3) -> (Cout, 3, 3, Cin) -> (Cout, 9*Cin), tap-major rows;
    # bf16 for the MXU (accumulation stays f32 in-kernel).
    w2 = jnp.transpose(w_oihw, (0, 2, 3, 1)).reshape(Cout, 9 * Cin)
    w2 = w2.astype(jnp.bfloat16)

    scale2 = scale.reshape(Cin, 1)
    shift2 = shift.reshape(Cin, 1)
    bias2 = bias.reshape(Cout, 1).astype(jnp.float32)

    kernel = _make_bn_relu_conv3_kernel(H, W, Cin)

    out_flat = pl.pallas_call(
        kernel,
        out_shape=jax.ShapeDtypeStruct((N, Cout, HW), jnp.float32),
        grid_spec=pltpu.PrefetchScalarGridSpec(
            num_scalar_prefetch=0,
            grid=(N,),
            in_specs=[
                pl.BlockSpec((1, Cin, HW), lambda n: (n, 0, 0)),      # x
                pl.BlockSpec((Cin, 1), lambda n: (0, 0)),             # scale
                pl.BlockSpec((Cin, 1), lambda n: (0, 0)),             # shift
                pl.BlockSpec((Cout, 9 * Cin), lambda n: (0, 0)),      # weights
                pl.BlockSpec((Cout, 1), lambda n: (0, 0)),            # bias
            ],
            out_specs=pl.BlockSpec((1, Cout, HW), lambda n: (n, 0, 0)),
            scratch_shapes=[pltpu.VMEM((9 * Cin, HW), jnp.float32)],  # im2col slab
        ),
        compiler_params=pltpu.CompilerParams(
            dimension_semantics=("parallel",)),
    )(x_flat, scale2, shift2, w2, bias2)

    return out_flat.reshape(N, Cout, H, W)


def _reference(x_nchw, gamma, beta, w_oihw, bias, eps=1e-5):
    """Pure-JAX f32 reference (training-mode BN + ReLU + 3x3 same conv)."""
    mean = jnp.mean(x_nchw, axis=(0, 2, 3), keepdims=True)
    var = jnp.var(x_nchw, axis=(0, 2, 3), keepdims=True)
    y = (x_nchw - mean) / jnp.sqrt(var + eps)
    y = y * gamma[None, :, None, None] + beta[None, :, None, None]
    y = jnp.maximum(y, 0.0)
    out = lax.conv_general_dilated(
        y, w_oihw, window_strides=(1, 1), padding="SAME",
        dimension_numbers=("NCHW", "OIHW", "NCHW"))
    return out + bias[None, :, None, None]


if __name__ == "__main__":
    N, Cin, H, W = 2, 4, 16, 16
    Cout = 8

    key = jax.random.PRNGKey(0)
    kx, kw, kb = jax.random.split(key, 3)

    x = jax.random.normal(kx, (N, Cin, H, W), dtype=jnp.float32)

    # BatchNorm2d default init: gamma=1, beta=0 (running stats unused in train mode).
    gamma = jnp.ones((Cin,), jnp.float32)
    beta = jnp.zeros((Cin,), jnp.float32)

    # Conv2d kaiming-uniform-style deterministic init.
    fan_in = Cin * 3 * 3
    bound = 1.0 / jnp.sqrt(fan_in)
    w = jax.random.uniform(kw, (Cout, Cin, 3, 3), jnp.float32, -bound, bound)
    b = jax.random.uniform(kb, (Cout,), jnp.float32, -bound, bound)

    out = bn_relu_conv3(x, gamma, beta, w, b)
    out = jax.block_until_ready(out)

    ref = _reference(x, gamma, beta, w, b)
    assert out.shape == (N, Cout, H, W)
    # bf16 MXU operands -> slightly looser tolerance than pure-f32.
    assert jnp.allclose(out, ref, atol=3e-2, rtol=3e-2), (
        f"max abs err {jnp.max(jnp.abs(out - ref))}")

    print("KERNEL_OK")
</pallas_src>

<mosaic_0001>
module attributes {stable_mosaic.version = 11 : i64} {
  func.func @_bn_stats_kernel(%arg0: i32, %arg1: memref<1x4x256xf32, #tpu.memory_space<vmem>>, %arg2: memref<4x1xf32, #tpu.memory_space<vmem>>, %arg3: memref<4x1xf32, #tpu.memory_space<vmem>>) attributes {dimension_semantics = [#tpu.dimension_semantics<arbitrary>], iteration_bounds = array<i64: 2>, scalar_prefetch = 0 : i64, scratch_operands = 0 : i64, tpu.core_type = #tpu.core_type<tc>, window_params = [{transform_indices = @transform_0, window_bounds = array<i64: 1, 4, 256>}, {pipeline_mode = #tpu.pipeline_mode<synchronous>, transform_indices = @transform_1, window_bounds = array<i64: 4, 1>}, {pipeline_mode = #tpu.pipeline_mode<synchronous>, transform_indices = @transform_2, window_bounds = array<i64: 4, 1>}]} {
    %c0_i32 = arith.constant 0 : i32
    %0 = arith.cmpi eq, %arg0, %c0_i32 : i32
    %1 = arith.extui %0 : i1 to i32
    %c0_i32_0 = arith.constant 0 : i32
    %2 = arith.cmpi ne, %1, %c0_i32_0 : i32
    scf.if %2 {
      %cst_12 = arith.constant 0.000000e+00 : f32
      %16 = vector.broadcast %cst_12 : f32 to vector<4x1xf32>
      %c0_13 = arith.constant 0 : index
      %c0_14 = arith.constant 0 : index
      %17 = vector.load %arg2[%c0_13, %c0_14] : memref<4x1xf32, #tpu.memory_space<vmem>>, vector<4x1xf32>
      tpu.vector_store %arg2[%c0_13, %c0_14], %16 {strides = array<i32>} : memref<4x1xf32, #tpu.memory_space<vmem>>, vector<4x1xf32>,
      %cst_15 = arith.constant 0.000000e+00 : f32
      %18 = vector.broadcast %cst_15 : f32 to vector<4x1xf32>
      %c0_16 = arith.constant 0 : index
      %c0_17 = arith.constant 0 : index
      %19 = vector.load %arg3[%c0_16, %c0_17] : memref<4x1xf32, #tpu.memory_space<vmem>>, vector<4x1xf32>
      tpu.vector_store %arg3[%c0_16, %c0_17], %18 {strides = array<i32>} : memref<4x1xf32, #tpu.memory_space<vmem>>, vector<4x1xf32>,
    } else {
    }
    %c0 = arith.constant 0 : index
    %c0_1 = arith.constant 0 : index
    %c0_2 = arith.constant 0 : index
    %3 = vector.load %arg1[%c0, %c0_1, %c0_2] : memref<1x4x256xf32, #tpu.memory_space<vmem>>, vector<1x4x256xf32>
    %4 = vector.shape_cast %3 : vector<1x4x256xf32> to vector<4x256xf32>
    %c0_3 = arith.constant 0 : index
    %c0_4 = arith.constant 0 : index
    %5 = vector.load %arg2[%c0_3, %c0_4] : memref<4x1xf32, #tpu.memory_space<vmem>>, vector<4x1xf32>
    %cst = arith.constant dense<0.000000e+00> : vector<4xf32>
    %6 = vector.multi_reduction <add>, %4, %cst [1] : vector<4x256xf32> to vector<4xf32>
    %7 = vector.shape_cast %6 : vector<4xf32> to vector<4x1xf32>
    %8 = arith.addf %5, %7 : vector<4x1xf32>
    %c0_5 = arith.constant 0 : index
    %c0_6 = arith.constant 0 : index
    %9 = vector.load %arg2[%c0_5, %c0_6] : memref<4x1xf32, #tpu.memory_space<vmem>>, vector<4x1xf32>
    tpu.vector_store %arg2[%c0_5, %c0_6], %8 {strides = array<i32>} : memref<4x1xf32, #tpu.memory_space<vmem>>, vector<4x1xf32>,
    %c0_7 = arith.constant 0 : index
    %c0_8 = arith.constant 0 : index
    %10 = vector.load %arg3[%c0_7, %c0_8] : memref<4x1xf32, #tpu.memory_space<vmem>>, vector<4x1xf32>
    %11 = arith.mulf %4, %4 : vector<4x256xf32>
    %cst_9 = arith.constant dense<0.000000e+00> : vector<4xf32>
    %12 = vector.multi_reduction <add>, %11, %cst_9 [1] : vector<4x256xf32> to vector<4xf32>
    %13 = vector.shape_cast %12 : vector<4xf32> to vector<4x1xf32>
    %14 = arith.addf %10, %13 : vector<4x1xf32>
    %c0_10 = arith.constant 0 : index
    %c0_11 = arith.constant 0 : index
    %15 = vector.load %arg3[%c0_10, %c0_11] : memref<4x1xf32, #tpu.memory_space<vmem>>, vector<4x1xf32>
    tpu.vector_store %arg3[%c0_10, %c0_11], %14 {strides = array<i32>} : memref<4x1xf32, #tpu.memory_space<vmem>>, vector<4x1xf32>,
    return
  }
  func.func @transform_0(%arg0: i32) -> (i32, i32, i32) {
    %c0_i32 = arith.constant 0 : i32
    %c0_i32_0 = arith.constant 0 : i32
    %c0_i32_1 = arith.constant 0 : i32
    return %arg0, %c0_i32, %c0_i32_0 : i32, i32, i32
  }
  func.func @transform_1(%arg0: i32) -> (i32, i32) {
    %c0_i32 = arith.constant 0 : i32
    %c0_i32_0 = arith.constant 0 : i32
    %c0_i32_1 = arith.constant 0 : i32
    return %c0_i32, %c0_i32_0 : i32, i32
  }
  func.func @transform_2(%arg0: i32) -> (i32, i32) {
    %c0_i32 = arith.constant 0 : i32
    %c0_i32_0 = arith.constant 0 : i32
    %c0_i32_1 = arith.constant 0 : i32
    return %c0_i32, %c0_i32_0 : i32, i32
  }
}

</mosaic_0001>

<llo_original>
// kernel: tpu_custom_call.1
$region0: #{tpu_custom_call.1}
  #allocation0 [shape = 'u32[]', space=smem, size = 0x4, offset = 0x4, fixed_abs, tag = 'smem constant byte address 0x4 - core index']
  #allocation1 [shape = 'u32[72,128]{1,0:T(1,128)}', space=vmem, size = 0x9000, scoped, tag = 'internal scratch']
  %s0 = inlined_call_operand.hbm [shape: f32[2,4,256], index: 0, kind: input, shape index: {}]
  %s1 = inlined_call_operand.vmem [shape: f32[4,1], index: 1, kind: output, shape index: {0}]
  %s2 = inlined_call_operand.vmem [shape: f32[4,1], index: 2, kind: output, shape index: {1}]
  %3 = xla_tuple %s1, %s2
  %s4 = sld [smem:[#allocation0]]
  $region53: #{tpu_custom_call.1} parent=0
    _
  %s6 = ssub.s32 1, %s4
  %s7 = scalar_select 0, %s6, %s4
  $region1: #{tpu_custom_call.1} parent=0
    #allocation2 [shape = 'u8[8192]{0}', space=vmem, size = 0x2000, scoped, tag = 'input window, operand 0']
    #allocation3 [shape = 's32[2]{0}', space=sflag, size = 0x8, scoped, tag = 'scoped memory for tpu_custom_call.1']
    %8 = vsyncpa [#allocation3], 0
    %s9 = scalar_lea.sflag [#allocation3], 1
    %10 = vsyncpa %s9, 0
    loop: start=0, step=1, limit=4
    $region2: #{tpu_custom_call.1} parent=1 // loop_pre_header
      _
    $region3: #{tpu_custom_call.1} parent=1 // loop_header
      %s12 = sphi 0, %s16
      %p13 = scmp.ge.s32.totalorder %s12, 4
      %s22 = sphi 0, %s24
      %s25 = sphi 0, %s22
      %s26 = sphi 0, %s25
      %s42 = sphi 0, %s26
      %s46 = sphi 0, %s46
      %s48 = sphi 0, %s46
      %s49 = sphi 0, %s48
      %s63 = sphi 0, %s49
      %s67 = sphi 0, %s67
      %s69 = sphi 0, %s67
      %s70 = sphi 0, %s69
      %s84 = sphi 0, %s70
    $region4: #{tpu_custom_call.1} parent=1 // loop_header_branch
      %15 = sbr.rel (%p13) target = $region8
    $region5: #{tpu_custom_call.1} parent=1 // loop_body
      %s17 = ssub.s32 %s12, 1
      %s18 = ssub.s32 %s12, 2
      %s19 = sadd.s32 %s12, 1
      %s20 = ssub.s32 %s12, %s19
      %p21 = scmp.eq.s32.totalorder %s20, 0
      %s23 = sadd.s32 %s22, 1
      %s24 = scalar_select %p21, %s22, %s23
      %p27 = pneg %p21
      %p28 = scmp.eq.s32.totalorder %s12, 1
      %p29 = por %p27, %p28
      %p30 = scmp.ne.s32.totalorder %s22, %s25
      %p31 = scmp.eq.s32.totalorder %s12, 0
      %p32 = por %p30, %p31
      %p33 = scmp.ne.s32.totalorder %s22, %s25
      %p34 = scmp.eq.s32.totalorder %s17, 1
      %p35 = por %p33, %p34
      %p36 = scmp.ne.s32.totalorder %s25, %s26
      %p37 = scmp.eq.s32.totalorder %s17, 0
      %p38 = por %p36, %p37
      %p39 = scmp.ne.s32.totalorder %s25, %s26
      %p40 = scmp.eq.s32.totalorder %s18, 1
      %p41 = por %p39, %p40
      %p43 = scmp.ne.s32.totalorder %s26, %s42
      %p44 = scmp.eq.s32.totalorder %s18, 0
      %p45 = por %p43, %p44
      %s47 = sadd.s32 %s46, 1
      %p50 = scmp.eq.s32.totalorder %s12, 1
      %p51 = scmp.ne.s32.totalorder %s46, %s48
      %p52 = scmp.eq.s32.totalorder %s12, 0
      %p53 = por %p51, %p52
      %p54 = scmp.ne.s32.totalorder %s46, %s48
      %p55 = scmp.eq.s32.totalorder %s17, 1
      %p56 = por %p54, %p55
      %p57 = scmp.ne.s32.totalorder %s48, %s49
      %p58 = scmp.eq.s32.totalorder %s17, 0
      %p59 = por %p57, %p58
      %p60 = scmp.ne.s32.totalorder %s48, %s49
      %p61 = scmp.eq.s32.totalorder %s18, 1
      %p62 = por %p60, %p61
      %p64 = scmp.ne.s32.totalorder %s49, %s63
      %p65 = scmp.eq.s32.totalorder %s18, 0
      %p66 = por %p64, %p65
      %s68 = sadd.s32 %s67, 1
      %p71 = scmp.eq.s32.totalorder %s12, 1
      %p72 = scmp.ne.s32.totalorder %s67, %s69
      %p73 = scmp.eq.s32.totalorder %s12, 0
      %p74 = por %p72, %p73
      %p75 = scmp.ne.s32.totalorder %s67, %s69
      %p76 = scmp.eq.s32.totalorder %s17, 1
      %p77 = por %p75, %p76
      %p78 = scmp.ne.s32.totalorder %s69, %s70
      %p79 = scmp.eq.s32.totalorder %s17, 0
      %p80 = por %p78, %p79
      %p81 = scmp.ne.s32.totalorder %s69, %s70
      %p82 = scmp.eq.s32.totalorder %s18, 1
      %p83 = por %p81, %p82
      %p85 = scmp.ne.s32.totalorder %s70, %s84
      %p86 = scmp.eq.s32.totalorder %s18, 0
      %p87 = por %p85, %p86
      %p88 = scmp.le.s32.totalorder 1, %s12
      %p89 = scmp.lt.s32.totalorder %s12, 3
      %p90 = pnand %p88, %p89
      %p91 = pneg %p90
      // Predicated region
      $region9: #{tpu_custom_call.1} parent=5 // pred_check
        _
      $region10: #{tpu_custom_call.1} parent=5 // pred_check_branch
        %93 = sbr.rel (%p90) target = $region12
      $region11: #{tpu_custom_call.1} parent=5 // pred_region
        %s94 = ssub.s32 %s12, 1
      $region12: #{tpu_custom_call.1} parent=5 // pred_fallthru
        _
      %p95 = scmp.lt.s32.totalorder %s12, 2
      // Predicated region
      $region13: #{tpu_custom_call.1} parent=5 // pred_check
        %p96 = pneg %p95
      $region14: #{tpu_custom_call.1} parent=5 // pred_check_branch
        %98 = sbr.rel (%p96) target = $region16
      $region15: #{tpu_custom_call.1} parent=5 // pred_region
        // Predicated region
        $region17: #{tpu_custom_call.1} parent=15 // pred_check
          %p99 = pneg %p32
        $region18: #{tpu_custom_call.1} parent=15 // pred_check_branch
          %101 = sbr.rel (%p99) target = $region20
        $region19: #{tpu_custom_call.1} parent=15 // pred_region
          %s102 = sand.u32 %s22, 1
          %s103 = scalar_lea.sflag [#allocation3], %s102
          %s104 = sand.u32 %s22, 1
          %s105 = smul.addr %s104, 8
          %s106 = scalar_lea.vmem [#allocation2], %s105
          %108 = vsyncadd %s103, 0
          %s109 = smul.addr %s12, 2
          %s110 = smul.addr %s109, 4
          %s111 = scalar_lea.hbm %s0, %s110
          %s113 = sshll.u32 %s111, 4
          %s114 = int_to_ptr.hbm [resolvable:$true] %s113
          %s115 = sshll.u32 %s106, 4
          %s116 = int_to_ptr.vmem [resolvable:$true] %s115
          %118 = dma.hbm_to_vmem [thread:$0]  %s114, 128, %s116, %s103
        $region20: #{tpu_custom_call.1} parent=15 // pred_fallthru
          _
      $region16: #{tpu_custom_call.1} parent=5 // pred_fallthru
        _
      %p119 = scmp.le.s32.totalorder 1, %s12
      %p120 = scmp.lt.s32.totalorder %s12, 3
      %p121 = pnand %p119, %p120
      %p122 = pneg %p121
      // Predicated region
      $region21: #{tpu_custom_call.1} parent=5 // pred_check
        _
      $region22: #{tpu_custom_call.1} parent=5 // pred_check_branch
        %124 = sbr.rel (%p121) target = $region24
      $region23: #{tpu_custom_call.1} parent=5 // pred_region
        %s125 = ssub.s32 %s12, 1
        %s126 = sand.u32 %s25, 1
        %s127 = scalar_lea.sflag [#allocation3], %s126
        %s128 = sand.u32 %s25, 1
        %s129 = smul.addr %s128, 8
        %s130 = scalar_lea.vmem [#allocation2], %s129
        // Predicated region
        $region25: #{tpu_custom_call.1} parent=23 // pred_check
          %p131 = pneg %p38
        $region26: #{tpu_custom_call.1} parent=23 // pred_check_branch
          %133 = sbr.rel (%p131) target = $region28
        $region27: #{tpu_custom_call.1} parent=23 // pred_region
          %135 = dma.done %s127, 128
        $region28: #{tpu_custom_call.1} parent=23 // pred_fallthru
          _
        %s136 = sand.u32 %s25, 1
        %s137 = scalar_lea.sflag [#allocation3], %s136
        %s138 = sand.u32 %s25, 1
        %s139 = smul.addr %s138, 8
        %s140 = scalar_lea.vmem [#allocation2], %s139
        %p141 = pneg %p38
        %p142 = pneg %p35
        %p143 = pneg %p59
        %p144 = pneg %p56
        %p145 = pneg %p80
        %p146 = pneg %p77
        %p147 = scmp.eq.s32.totalorder %s17, 0
        // Predicated region
        $region29: #{tpu_custom_call.1} parent=23 // pred_check
          %p148 = pneg %p147
        $region30: #{tpu_custom_call.1} parent=23 // pred_check_branch
          %150 = sbr.rel (%p148) target = $region32
        $region31: #{tpu_custom_call.1} parent=23 // pred_region
          %vm151 = vcmask 3072
          %152 = vst.msk [vmem:[%s1] sm:$0xf] %vm151, 0.0
          %153 = vst.msk [vmem:[%s2] sm:$0xf] %vm151, 0.0
        $region32: #{tpu_custom_call.1} parent=23 // pred_fallthru
          _
        %v154 = vld [vmem:[%s130] sm:$0xff]
        %v155 = vld [vmem:[%s1] sm:$0xf]
        %157 = vst [vmem:[#allocation1] ss:$2 sm:$0xff] %v154
        %v158 = vld.sshfl [vmem:[#allocation1] sm:$0xff pattern:$0x75316420]
        %v159 = vld.sshfl [vmem:[#allocation1 + $0x8] sm:$0xff pattern:$0x75316420]
        %vm162 = vcmask 1043456
        %v163 = vsel %vm162, %v158, 0.0
        %v164 = vsel %vm162, %v159, 0.0
        %v165 = vadd.f32 %v163, %v164
        %166 = vadd.xlane.f32.xlu0 %v165
        %v167 = vpop.xlane.xlu0 %166
        %v168 = vadd.f32 %v155, %v167
        %vm169 = vcmask 3072
        %170 = vst.msk [vmem:[%s1] sm:$0xf] %vm169, %v168
        %v171 = vld [vmem:[%s2] sm:$0xf]
        %v172 = vmul.f32 %v154, %v154
        %174 = vst [vmem:[#allocation1] ss:$2 sm:$0xff] %v172
        %v175 = vld.sshfl [vmem:[#allocation1] sm:$0xff pattern:$0x75316420]
        %v176 = vld.sshfl [vmem:[#allocation1 + $0x8] sm:$0xff pattern:$0x75316420]
        %v179 = vsel %vm162, %v175, 0.0
        %v180 = vsel %vm162, %v176, 0.0
        %v181 = vadd.f32 %v179, %v180
        %182 = vadd.xlane.f32.xlu0 %v181
        %v183 = vpop.xlane.xlu0 %182
        %v184 = vadd.f32 %v171, %v183
        %185 = vst.msk [vmem:[%s2] sm:$0xf] %vm169, %v184
        // Predicated region
        $region33: #{tpu_custom_call.1} parent=23 // pred_check
          %p186 = pneg %p56
        $region34: #{tpu_custom_call.1} parent=23 // pred_check_branch
          %188 = sbr.rel (%p186) target = $region36
        $region35: #{tpu_custom_call.1} parent=23 // pred_region
          _
        $region36: #{tpu_custom_call.1} parent=23 // pred_fallthru
          _
        // Predicated region
        $region37: #{tpu_custom_call.1} parent=23 // pred_check
          %p189 = pneg %p77
        $region38: #{tpu_custom_call.1} parent=23 // pred_check_branch
          %191 = sbr.rel (%p189) target = $region40
        $region39: #{tpu_custom_call.1} parent=23 // pred_region
          _
        $region40: #{tpu_custom_call.1} parent=23 // pred_fallthru
          _
        // Predicated region
        $region41: #{tpu_custom_call.1} parent=23 // pred_check
          %p192 = pneg %p56
        $region42: #{tpu_custom_call.1} parent=23 // pred_check_branch
          %194 = sbr.rel (%p192) target = $region44
        $region43: #{tpu_custom_call.1} parent=23 // pred_region
          _
        $region44: #{tpu_custom_call.1} parent=23 // pred_fallthru
          _
        // Predicated region
        $region45: #{tpu_custom_call.1} parent=23 // pred_check
          %p195 = pneg %p77
        $region46: #{tpu_custom_call.1} parent=23 // pred_check_branch
          %197 = sbr.rel (%p195) target = $region48
        $region47: #{tpu_custom_call.1} parent=23 // pred_region
          _
        $region48: #{tpu_custom_call.1} parent=23 // pred_fallthru
          _
      $region24: #{tpu_custom_call.1} parent=5 // pred_fallthru
        _
      %p198 = scmp.le.s32.totalorder 2, %s12
      // Predicated region
      $region49: #{tpu_custom_call.1} parent=5 // pred_check
        %p199 = pneg %p198
      $region50: #{tpu_custom_call.1} parent=5 // pred_check_branch
        %201 = sbr.rel (%p199) target = $region52
      $region51: #{tpu_custom_call.1} parent=5 // pred_region
        %s202 = ssub.s32 %s12, 2
      $region52: #{tpu_custom_call.1} parent=5 // pred_fallthru
        _
    $region6: #{tpu_custom_call.1} parent=1 // loop_footer
      %s16 = sadd.s32 1, %s12
    $region7: #{tpu_custom_call.1} parent=1 // loop_footer_branch
      %11 = sbr.rel target = $region3
    $region8: #{tpu_custom_call.1} parent=1 // loop_exit
      _
    %203 = vsyncpa [#allocation3], 1
    %s204 = scalar_lea.sflag [#allocation3], 1
    %205 = vsyncpa %s204, 1

</llo_original>
